<compile_context>
chip_gen: v7x
topology: tpu7x:2x2x1
jax: 0.10.0
libtpu: 0.0.40
codegen_flags: <defaults>
</compile_context>

<pallas_src>
import functools

import jax
import jax.numpy as jnp
from jax.experimental import pallas as pl
from jax.experimental.pallas import tpu as pltpu

_LANE = 128


def _round_up(x, m):
    return ((x + m - 1) // m) * m


def _combine_kernel(bias_ref, su_ref, si_ref, fd_ref, o_ref):
    """Final accumulation of the linear head, one lane-dense batch tile.

    bias_ref : SMEM [1]        fc_bias + global_bias (pre-summed)
    su_ref   : VMEM [1, TB]    user_embedding(user) . w_user   (pre-contracted)
    si_ref   : VMEM [1, TB]    item_embedding(item) . w_item   (pre-contracted)
    fd_ref   : VMEM [1, TB]    item_feature . w_feat
    o_ref    : VMEM [1, TB]    predicted rating (pre-sigmoid), lane-dense
    """
    o_ref[...] = su_ref[...] + si_ref[...] + fd_ref[...] + bias_ref[0]


@functools.partial(jax.jit, static_argnames=("tile_bytes",))
def linear_regression_rating_forward(user, item, item_feature, params,
                                     *, tile_bytes=1 << 20):
    """Equivalent of LinearRegressionRatingPrediction.forward -> [B, 1] f32."""
    user_tbl = params["user_embedding"]          # [num_users, D]
    item_tbl = params["item_embedding"]          # [num_items, D]
    w = params["fc_weight"]                      # [1, 2D+F]  (torch layout)
    bias = (params["fc_bias"] + params["global_bias"]).astype(jnp.float32)  # [1]

    B = user.shape[0]
    D = user_tbl.shape[1]
    F = item_feature.shape[-1]
    hi = jax.lax.Precision.HIGHEST

    # ---- batch tiling -----------------------------------------------------
    # Lanes per step from a per-buffer byte budget (f32): 1 MiB -> 262144 lanes.
    TB_target = max(_LANE, (int(tile_bytes) // 4 // _LANE) * _LANE)
    B_lane = _round_up(B, _LANE)
    # Guarantee >= 2 grid steps whenever the batch spans >= 2 lane tiles so the
    # "parallel" grid axis actually feeds both TensorCores on v7x.
    if B_lane >= 2 * _LANE:
        TB_cap = _round_up((B_lane + 1) // 2, _LANE)
    else:
        TB_cap = _LANE
    TB = min(TB_target, TB_cap)
    B_pad = _round_up(B, TB)
    grid = (B_pad // TB,)

    # ---- algebraic pre-contraction (exact for a linear head) --------------
    w_u = w[0, :D].astype(jnp.float32)           # [D]
    w_i = w[0, D:2 * D].astype(jnp.float32)      # [D]
    w_f = w[0, 2 * D:].astype(jnp.float32)       # [F]

    su_tbl = jnp.dot(user_tbl.astype(jnp.float32), w_u, precision=hi)   # [num_users]
    si_tbl = jnp.dot(item_tbl.astype(jnp.float32), w_i, precision=hi)   # [num_items]

    su_b = jnp.take(su_tbl, user, axis=0)                               # [B]
    si_b = jnp.take(si_tbl, item, axis=0)                               # [B]
    fdot = jnp.dot(item_feature.astype(jnp.float32), w_f, precision=hi)  # [B]

    def _row(v):  # pad to the tiled batch and present batch on the lane axis
        return jnp.pad(v, (0, B_pad - B)).reshape(1, B_pad)

    su_b, si_b, fdot = _row(su_b), _row(si_b), _row(fdot)               # [1, B_pad]

    # ---- pallas: lane-dense fused combine ---------------------------------
    row_spec = pl.BlockSpec((1, TB), lambda b: (0, b))
    out = pl.pallas_call(
        _combine_kernel,
        out_shape=jax.ShapeDtypeStruct((1, B_pad), jnp.float32),
        grid_spec=pltpu.PrefetchScalarGridSpec(
            num_scalar_prefetch=0,
            grid=grid,
            in_specs=[
                pl.BlockSpec(memory_space=pltpu.MemorySpace.SMEM),  # bias scalar
                row_spec,                                           # user score
                row_spec,                                           # item score
                row_spec,                                           # feature dot
            ],
            out_specs=pl.BlockSpec((1, TB), lambda b: (0, b)),      # lane-dense out
        ),
        compiler_params=pltpu.CompilerParams(
            dimension_semantics=("parallel",)),
    )(bias, su_b, si_b, fdot)

    return out[0, :B].reshape(B, 1)


def init_params(key, num_users, num_items, embedding_dim, item_feature_size):
    """Deterministic synthetic parameter init mirroring the torch module shapes."""
    k1, k2, k3, k4 = jax.random.split(key, 4)
    input_size = embedding_dim * 2 + item_feature_size
    bound = 1.0 / jnp.sqrt(input_size)
    return {
        # nn.Embedding default: N(0, 1)
        "user_embedding": jax.random.normal(k1, (num_users, embedding_dim),
                                            jnp.float32),
        "item_embedding": jax.random.normal(k2, (num_items, embedding_dim),
                                            jnp.float32),
        # nn.Linear default: U(-1/sqrt(fan_in), 1/sqrt(fan_in))
        "fc_weight": jax.random.uniform(k3, (1, input_size), jnp.float32,
                                        -bound, bound),
        "fc_bias": jax.random.uniform(k4, (1,), jnp.float32, -bound, bound),
        "global_bias": jnp.zeros((1,), jnp.float32),
    }


def reference_forward(user, item, item_feature, params):
    """Pure-JAX reference (mirrors the torch forward) at full f32 precision."""
    u = jnp.take(params["user_embedding"], user, axis=0)
    i = jnp.take(params["item_embedding"], item, axis=0)
    x = jnp.concatenate([u, i, item_feature.astype(jnp.float32)], axis=-1)
    y = jnp.dot(x, params["fc_weight"].T.astype(jnp.float32),
                precision=jax.lax.Precision.HIGHEST) + params["fc_bias"]
    return y + params["global_bias"]


if __name__ == "__main__":
    num_users, num_items = 50, 80
    embedding_dim = 16
    item_feature_size = 8
    batch = 200          # spans 2 lane tiles -> exercises padding + 2 grid steps

    key = jax.random.PRNGKey(0)
    kp, ku, ki, kf = jax.random.split(key, 4)

    params = init_params(kp, num_users, num_items, embedding_dim,
                         item_feature_size)
    user = jax.random.randint(ku, (batch,), 0, num_users, jnp.int32)
    item = jax.random.randint(ki, (batch,), 0, num_items, jnp.int32)
    item_feature = jax.random.normal(kf, (batch, item_feature_size),
                                     jnp.float32)

    out = linear_regression_rating_forward(user, item, item_feature, params)
    out = jax.block_until_ready(out)

    ref = reference_forward(user, item, item_feature, params)
    assert out.shape == (batch, 1)
    assert jnp.allclose(out, ref, atol=1e-4, rtol=1e-5), (out, ref)

    # TODO(synk): predict()'s sigmoid and recommend()'s top-k batching loop are
    # host-side glue around this forward and are intentionally left to plain JAX.
    print("KERNEL_OK")
</pallas_src>

<mosaic_0001>
module attributes {stable_mosaic.version = 11 : i64} {
  func.func @_combine_kernel(%arg0: i32, %arg1: memref<1xf32, #tpu.memory_space<smem>>, %arg2: memref<1x128xf32, #tpu.memory_space<vmem>>, %arg3: memref<1x128xf32, #tpu.memory_space<vmem>>, %arg4: memref<1x128xf32, #tpu.memory_space<vmem>>, %arg5: memref<1x128xf32, #tpu.memory_space<vmem>>) attributes {dimension_semantics = [#tpu.dimension_semantics<parallel>], iteration_bounds = array<i64: 2>, scalar_prefetch = 0 : i64, scratch_operands = 0 : i64, tpu.core_type = #tpu.core_type<tc>, window_params = [{transform_indices = @transform_0, window_bounds = array<i64: 1>}, {transform_indices = @transform_1, window_bounds = array<i64: 1, 128>}, {transform_indices = @transform_2, window_bounds = array<i64: 1, 128>}, {transform_indices = @transform_3, window_bounds = array<i64: 1, 128>}, {transform_indices = @transform_4, window_bounds = array<i64: 1, 128>}]} {
    %c0 = arith.constant 0 : index
    %c0_0 = arith.constant 0 : index
    %0 = vector.load %arg2[%c0, %c0_0] : memref<1x128xf32, #tpu.memory_space<vmem>>, vector<1x128xf32>
    %c0_1 = arith.constant 0 : index
    %c0_2 = arith.constant 0 : index
    %1 = vector.load %arg3[%c0_1, %c0_2] : memref<1x128xf32, #tpu.memory_space<vmem>>, vector<1x128xf32>
    %2 = arith.addf %0, %1 : vector<1x128xf32>
    %c0_3 = arith.constant 0 : index
    %c0_4 = arith.constant 0 : index
    %3 = vector.load %arg4[%c0_3, %c0_4] : memref<1x128xf32, #tpu.memory_space<vmem>>, vector<1x128xf32>
    %4 = arith.addf %2, %3 : vector<1x128xf32>
    %c0_5 = arith.constant 0 : index
    %5 = memref.load %arg1[%c0_5] : memref<1xf32, #tpu.memory_space<smem>>
    %6 = vector.broadcast %5 : f32 to vector<1x128xf32>
    %7 = arith.addf %4, %6 : vector<1x128xf32>
    %c0_6 = arith.constant 0 : index
    %c0_7 = arith.constant 0 : index
    %8 = vector.load %arg5[%c0_6, %c0_7] : memref<1x128xf32, #tpu.memory_space<vmem>>, vector<1x128xf32>
    tpu.vector_store %arg5[%c0_6, %c0_7], %7 {strides = array<i32>} : memref<1x128xf32, #tpu.memory_space<vmem>>, vector<1x128xf32>,
    return
  }
  func.func @transform_0(%arg0: i32) -> i32 {
    %c0_i32 = arith.constant 0 : i32
    %c0_i32_0 = arith.constant 0 : i32
    return %c0_i32 : i32
  }
  func.func @transform_1(%arg0: i32) -> (i32, i32) {
    %c0_i32 = arith.constant 0 : i32
    %c0_i32_0 = arith.constant 0 : i32
    return %c0_i32, %arg0 : i32, i32
  }
  func.func @transform_2(%arg0: i32) -> (i32, i32) {
    %c0_i32 = arith.constant 0 : i32
    %c0_i32_0 = arith.constant 0 : i32
    return %c0_i32, %arg0 : i32, i32
  }
  func.func @transform_3(%arg0: i32) -> (i32, i32) {
    %c0_i32 = arith.constant 0 : i32
    %c0_i32_0 = arith.constant 0 : i32
    return %c0_i32, %arg0 : i32, i32
  }
  func.func @transform_4(%arg0: i32) -> (i32, i32) {
    %c0_i32 = arith.constant 0 : i32
    %c0_i32_0 = arith.constant 0 : i32
    return %c0_i32, %arg0 : i32, i32
  }
}

</mosaic_0001>

<llo_original>
// kernel: linear_regression_rating_forward.1
$region0: #{linear_regression_rating_forward.1}
  #allocation0 [shape = 'u32[]', space=smem, size = 0x4, offset = 0x4, fixed_abs, tag = 'smem constant byte address 0x4 - core index']
  #allocation1 [shape = 'u32[144,128]{1,0:T(1,128)}', space=vmem, size = 0x12000, scoped, tag = 'internal scratch']
  #allocation2 [shape = 'f32[1]{0:T(128)S(6)}', space=smem, size = 0x200, scoped, tag = 'scoped memory for linear_regression_rating_forward.1']
  %s0 = inlined_call_operand.<no memory space> [shape: f32[1], index: 0, kind: input, shape index: {}]
  %s1 = inlined_call_operand.vmem [shape: f32[1,256], index: 1, kind: input, shape index: {}]
  %s2 = inlined_call_operand.vmem [shape: f32[1,256], index: 2, kind: input, shape index: {}]
  %s3 = inlined_call_operand.vmem [shape: f32[1,256], index: 3, kind: input, shape index: {}]
  %s4 = inlined_call_operand.vmem [shape: f32[1,256], index: 4, kind: output, shape index: {}]
  %s5 = sld [smem:[#allocation0]]
  $region49: #{linear_regression_rating_forward.1} parent=0
    _
  %s7 = ssub.s32 1, %s5
  %s8 = scalar_select 0, %s7, %s5
  %9 = sst [smem:[#allocation2]] %s0
  loop: start=0, step=1, limit=4
  $region2: #{linear_regression_rating_forward.1} parent=0 // loop_pre_header
    _
  $region3: #{linear_regression_rating_forward.1} parent=0 // loop_header
    %s11 = sphi 0, %s15
    %p12 = scmp.ge.s32.totalorder %s11, 4
    %s19 = sphi 0, %s19
    %s21 = sphi 0, %s19
    %s22 = sphi 0, %s21
    %s36 = sphi 0, %s22
    %s42 = sphi 0, %s44
    %s45 = sphi 0, %s42
    %s46 = sphi 0, %s45
    %s62 = sphi 0, %s46
    %s68 = sphi 0, %s70
    %s71 = sphi 0, %s68
    %s72 = sphi 0, %s71
    %s88 = sphi 0, %s72
    %s94 = sphi 0, %s96
    %s97 = sphi 0, %s94
    %s98 = sphi 0, %s97
    %s114 = sphi 0, %s98
    %s120 = sphi 0, %s122
    %s123 = sphi 0, %s120
    %s124 = sphi 0, %s123
    %s140 = sphi 0, %s124
  $region4: #{linear_regression_rating_forward.1} parent=0 // loop_header_branch
    %14 = sbr.rel (%p12) target = $region8
  $region5: #{linear_regression_rating_forward.1} parent=0 // loop_body
    %s16 = ssub.s32 %s11, 1
    %s17 = ssub.s32 %s11, 2
    %s18 = sadd.s32 %s11, 1
    %s20 = sadd.s32 %s19, 1
    %p23 = scmp.eq.s32.totalorder %s11, 1
    %p24 = scmp.ne.s32.totalorder %s19, %s21
    %p25 = scmp.eq.s32.totalorder %s11, 0
    %p26 = por %p24, %p25
    %p27 = scmp.ne.s32.totalorder %s19, %s21
    %p28 = scmp.eq.s32.totalorder %s16, 1
    %p29 = por %p27, %p28
    %p30 = scmp.ne.s32.totalorder %s21, %s22
    %p31 = scmp.eq.s32.totalorder %s16, 0
    %p32 = por %p30, %p31
    %p33 = scmp.ne.s32.totalorder %s21, %s22
    %p34 = scmp.eq.s32.totalorder %s17, 1
    %p35 = por %p33, %p34
    %p37 = scmp.ne.s32.totalorder %s22, %s36
    %p38 = scmp.eq.s32.totalorder %s17, 0
    %p39 = por %p37, %p38
    %s40 = ssub.s32 %s11, %s18
    %p41 = scmp.eq.s32.totalorder %s40, 0
    %s43 = sadd.s32 %s42, 1
    %s44 = scalar_select %p41, %s42, %s43
    %p47 = pneg %p41
    %p48 = scmp.eq.s32.totalorder %s11, 1
    %p49 = por %p47, %p48
    %p50 = scmp.ne.s32.totalorder %s42, %s45
    %p51 = scmp.eq.s32.totalorder %s11, 0
    %p52 = por %p50, %p51
    %p53 = scmp.ne.s32.totalorder %s42, %s45
    %p54 = scmp.eq.s32.totalorder %s16, 1
    %p55 = por %p53, %p54
    %p56 = scmp.ne.s32.totalorder %s45, %s46
    %p57 = scmp.eq.s32.totalorder %s16, 0
    %p58 = por %p56, %p57
    %p59 = scmp.ne.s32.totalorder %s45, %s46
    %p60 = scmp.eq.s32.totalorder %s17, 1
    %p61 = por %p59, %p60
    %p63 = scmp.ne.s32.totalorder %s46, %s62
    %p64 = scmp.eq.s32.totalorder %s17, 0
    %p65 = por %p63, %p64
    %s66 = ssub.s32 %s11, %s18
    %p67 = scmp.eq.s32.totalorder %s66, 0
    %s69 = sadd.s32 %s68, 1
    %s70 = scalar_select %p67, %s68, %s69
    %p73 = pneg %p67
    %p74 = scmp.eq.s32.totalorder %s11, 1
    %p75 = por %p73, %p74
    %p76 = scmp.ne.s32.totalorder %s68, %s71
    %p77 = scmp.eq.s32.totalorder %s11, 0
    %p78 = por %p76, %p77
    %p79 = scmp.ne.s32.totalorder %s68, %s71
    %p80 = scmp.eq.s32.totalorder %s16, 1
    %p81 = por %p79, %p80
    %p82 = scmp.ne.s32.totalorder %s71, %s72
    %p83 = scmp.eq.s32.totalorder %s16, 0
    %p84 = por %p82, %p83
    %p85 = scmp.ne.s32.totalorder %s71, %s72
    %p86 = scmp.eq.s32.totalorder %s17, 1
    %p87 = por %p85, %p86
    %p89 = scmp.ne.s32.totalorder %s72, %s88
    %p90 = scmp.eq.s32.totalorder %s17, 0
    %p91 = por %p89, %p90
    %s92 = ssub.s32 %s11, %s18
    %p93 = scmp.eq.s32.totalorder %s92, 0
    %s95 = sadd.s32 %s94, 1
    %s96 = scalar_select %p93, %s94, %s95
    %p99 = pneg %p93
    %p100 = scmp.eq.s32.totalorder %s11, 1
    %p101 = por %p99, %p100
    %p102 = scmp.ne.s32.totalorder %s94, %s97
    %p103 = scmp.eq.s32.totalorder %s11, 0
    %p104 = por %p102, %p103
    %p105 = scmp.ne.s32.totalorder %s94, %s97
    %p106 = scmp.eq.s32.totalorder %s16, 1
    %p107 = por %p105, %p106
    %p108 = scmp.ne.s32.totalorder %s97, %s98
    %p109 = scmp.eq.s32.totalorder %s16, 0
    %p110 = por %p108, %p109
    %p111 = scmp.ne.s32.totalorder %s97, %s98
    %p112 = scmp.eq.s32.totalorder %s17, 1
    %p113 = por %p111, %p112
    %p115 = scmp.ne.s32.totalorder %s98, %s114
    %p116 = scmp.eq.s32.totalorder %s17, 0
    %p117 = por %p115, %p116
    %s118 = ssub.s32 %s11, %s18
    %p119 = scmp.eq.s32.totalorder %s118, 0
    %s121 = sadd.s32 %s120, 1
    %s122 = scalar_select %p119, %s120, %s121
    %p125 = pneg %p119
    %p126 = scmp.eq.s32.totalorder %s11, 1
    %p127 = por %p125, %p126
    %p128 = scmp.ne.s32.totalorder %s120, %s123
    %p129 = scmp.eq.s32.totalorder %s11, 0
    %p130 = por %p128, %p129
    %p131 = scmp.ne.s32.totalorder %s120, %s123
    %p132 = scmp.eq.s32.totalorder %s16, 1
    %p133 = por %p131, %p132
    %p134 = scmp.ne.s32.totalorder %s123, %s124
    %p135 = scmp.eq.s32.totalorder %s16, 0
    %p136 = por %p134, %p135
    %p137 = scmp.ne.s32.totalorder %s123, %s124
    %p138 = scmp.eq.s32.totalorder %s17, 1
    %p139 = por %p137, %p138
    %p141 = scmp.ne.s32.totalorder %s124, %s140
    %p142 = scmp.eq.s32.totalorder %s17, 0
    %p143 = por %p141, %p142
    %p144 = scmp.le.s32.totalorder 1, %s11
    %p145 = scmp.lt.s32.totalorder %s11, 3
    %p146 = pnand %p144, %p145
    %p147 = pneg %p146
    // Predicated region
    $region9: #{linear_regression_rating_forward.1} parent=5 // pred_check
      _
    $region10: #{linear_regression_rating_forward.1} parent=5 // pred_check_branch
      %149 = sbr.rel (%p146) target = $region12
    $region11: #{linear_regression_rating_forward.1} parent=5 // pred_region
      %s150 = ssub.s32 %s11, 1
      // Predicated region
      $region13: #{linear_regression_rating_forward.1} parent=11 // pred_check
        %p151 = pneg %p32
      $region14: #{linear_regression_rating_forward.1} parent=11 // pred_check_branch
        %153 = sbr.rel (%p151) target = $region16
      $region15: #{linear_regression_rating_forward.1} parent=11 // pred_region
        _
      $region16: #{linear_regression_rating_forward.1} parent=11 // pred_fallthru
        _
    $region12: #{linear_regression_rating_forward.1} parent=5 // pred_fallthru
      _
    %p154 = scmp.lt.s32.totalorder %s11, 2
    // Predicated region
    $region17: #{linear_regression_rating_forward.1} parent=5 // pred_check
      %p155 = pneg %p154
    $region18: #{linear_regression_rating_forward.1} parent=5 // pred_check_branch
      %157 = sbr.rel (%p155) target = $region20
    $region19: #{linear_regression_rating_forward.1} parent=5 // pred_region
      // Predicated region
      $region21: #{linear_regression_rating_forward.1} parent=19 // pred_check
        %p158 = pneg %p52
      $region22: #{linear_regression_rating_forward.1} parent=19 // pred_check_branch
        %160 = sbr.rel (%p158) target = $region24
      $region23: #{linear_regression_rating_forward.1} parent=19 // pred_region
        %p161 = scmp.lt.s32.totalorder %s11, 1
        %s162 = scalar_select %p161, %s11, 1
        %s163 = scalar_lea.vmem %s1, %s162
      $region24: #{linear_regression_rating_forward.1} parent=19 // pred_fallthru
        _
      // Predicated region
      $region25: #{linear_regression_rating_forward.1} parent=19 // pred_check
        %p164 = pneg %p78
      $region26: #{linear_regression_rating_forward.1} parent=19 // pred_check_branch
        %166 = sbr.rel (%p164) target = $region28
      $region27: #{linear_regression_rating_forward.1} parent=19 // pred_region
        %p167 = scmp.lt.s32.totalorder %s11, 1
        %s168 = scalar_select %p167, %s11, 1
        %s169 = scalar_lea.vmem %s2, %s168
      $region28: #{linear_regression_rating_forward.1} parent=19 // pred_fallthru
        _
      // Predicated region
      $region29: #{linear_regression_rating_forward.1} parent=19 // pred_check
        %p170 = pneg %p104
      $region30: #{linear_regression_rating_forward.1} parent=19 // pred_check_branch
        %172 = sbr.rel (%p170) target = $region32
      $region31: #{linear_regression_rating_forward.1} parent=19 // pred_region
        %p173 = scmp.lt.s32.totalorder %s11, 1
        %s174 = scalar_select %p173, %s11, 1
        %s175 = scalar_lea.vmem %s3, %s174
      $region32: #{linear_regression_rating_forward.1} parent=19 // pred_fallthru
        _
    $region20: #{linear_regression_rating_forward.1} parent=5 // pred_fallthru
      _
    %p176 = scmp.le.s32.totalorder 1, %s11
    %p177 = scmp.lt.s32.totalorder %s11, 3
    %p178 = pnand %p176, %p177
    %p179 = pneg %p178
    // Predicated region
    $region33: #{linear_regression_rating_forward.1} parent=5 // pred_check
      _
    $region34: #{linear_regression_rating_forward.1} parent=5 // pred_check_branch
      %181 = sbr.rel (%p178) target = $region36
    $region35: #{linear_regression_rating_forward.1} parent=5 // pred_region
      %s182 = ssub.s32 %s11, 1
      %p183 = pneg %p32
      %p184 = pneg %p29
      %p185 = scmp.lt.s32.totalorder %s16, 1
      %s186 = scalar_select %p185, %s16, 1
      %s187 = scalar_lea.vmem %s1, %s186
      %p188 = pneg %p58
      %p189 = pneg %p55
      %p190 = scmp.lt.s32.totalorder %s16, 1
      %s191 = scalar_select %p190, %s16, 1
      %s192 = scalar_lea.vmem %s2, %s191
      %p193 = pneg %p84
      %p194 = pneg %p81
      %p195 = scmp.lt.s32.totalorder %s16, 1
      %s196 = scalar_select %p195, %s16, 1
      %s197 = scalar_lea.vmem %s3, %s196
      %p198 = pneg %p110
      %p199 = pneg %p107
      %p200 = pneg %p136
      %p201 = pneg %p133
      %p202 = scmp.lt.s32.totalorder %s16, 1
      %s203 = scalar_select %p202, %s16, 1
      %s204 = scalar_lea.vmem %s4, %s203
      %p205 = scmp.lt.s32.totalorder %s16, 1
      %s206 = scalar_select %p205, %s16, 1
      %s207 = scalar_lea.vmem %s1, %s206
      %p208 = scmp.lt.s32.totalorder %s16, 1
      %s209 = scalar_select %p208, %s16, 1
      %s210 = scalar_lea.vmem %s2, %s209
      %p211 = scmp.lt.s32.totalorder %s16, 1
      %s212 = scalar_select %p211, %s16, 1
      %s213 = scalar_lea.vmem %s3, %s212
      %p214 = scmp.lt.s32.totalorder %s16, 1
      %s215 = scalar_select %p214, %s16, 1
      %s216 = scalar_lea.vmem %s4, %s215
      %v217 = vld [vmem:[%s207] sm:$0x1]
      %v218 = vld [vmem:[%s210] sm:$0x1]
      %v219 = vadd.f32 %v217, %v218
      %v220 = vld [vmem:[%s213] sm:$0x1]
      %v221 = vadd.f32 %v219, %v220
      %s222 = sld [smem:[#allocation2]]
      %v223 = vstv %s222
      %v224 = vadd.f32 %v221, %v223
      %225 = vst [vmem:[%s216] sm:$0x1] %v224
      %p226 = scmp.lt.s32.totalorder %s16, 1
      %s227 = scalar_select %p226, %s16, 1
      %s228 = scalar_lea.vmem %s4, %s227
      // Predicated region
      $region37: #{linear_regression_rating_forward.1} parent=35 // pred_check
        %p229 = pneg %p133
      $region38: #{linear_regression_rating_forward.1} parent=35 // pred_check_branch
        %231 = sbr.rel (%p229) target = $region40
      $region39: #{linear_regression_rating_forward.1} parent=35 // pred_region
        _
      $region40: #{linear_regression_rating_forward.1} parent=35 // pred_fallthru
        _
    $region36: #{linear_regression_rating_forward.1} parent=5 // pred_fallthru
      _
    %p232 = scmp.le.s32.totalorder 2, %s11
    // Predicated region
    $region41: #{linear_regression_rating_forward.1} parent=5 // pred_check
      %p233 = pneg %p232
    $region42: #{linear_regression_rating_forward.1} parent=5 // pred_check_branch
      %235 = sbr.rel (%p233) target = $region44
    $region43: #{linear_regression_rating_forward.1} parent=5 // pred_region
      %s236 = ssub.s32 %s11, 2
      // Predicated region
      $region45: #{linear_regression_rating_forward.1} parent=43 // pred_check
        %p237 = pneg %p139
      $region46: #{linear_regression_rating_forward.1} parent=43 // pred_check_branch
        %239 = sbr.rel (%p237) target = $region48
      $region47: #{linear_regression_rating_forward.1} parent=43 // pred_region
        %p240 = scmp.lt.s32.totalorder %s17, 1
        %s241 = scalar_select %p240, %s17, 1
        %s242 = scalar_lea.vmem %s4, %s241
      $region48: #{linear_regression_rating_forward.1} parent=43 // pred_fallthru
        _
    $region44: #{linear_regression_rating_forward.1} parent=5 // pred_fallthru
      _
  $region6: #{linear_regression_rating_forward.1} parent=0 // loop_footer
    %s15 = sadd.s32 1, %s11
  $region7: #{linear_regression_rating_forward.1} parent=0 // loop_footer_branch
    %10 = sbr.rel target = $region3
  $region8: #{linear_regression_rating_forward.1} parent=0 // loop_exit
    _

</llo_original>
